<compile_context>
chip_gen: v7x
topology: tpu7x:2x2x1
jax: 0.10.0
libtpu: 0.0.40
codegen_flags: <defaults>
</compile_context>

<pallas_src>
import jax
import jax.numpy as jnp
from jax import lax
from jax.experimental import pallas as pl
from jax.experimental.pallas import tpu as pltpu


def _regl1_kernel(feat_ref,   # VMEM (1, C, HW)  native-layout feature slice, source dtype
                  ind_ref,    # VMEM (1, 1, K)   int32 gather indices for this batch
                  mask_ref,   # VMEM (1, 1, K)   mask for this batch (not expanded)
                  tgt_ref,    # VMEM (1, C, K)   targets for this batch, source dtype
                  loss_ref,   # VMEM (1, 1)      scalar loss output (written at last step)
                  num_acc,    # VMEM (1, 1) f32  running |diff| sum
                  den_acc):   # VMEM (1, 1) f32  running mask sum (already x C)
    b = pl.program_id(0)

    @pl.when(b == 0)
    def _():
        num_acc[...] = jnp.zeros_like(num_acc)
        den_acc[...] = jnp.zeros_like(den_acc)

    feat = feat_ref[0]                           # (C, HW) source dtype, lane-dense in HW
    idx = ind_ref[0]                             # (1, K) int32
    m = mask_ref[0].astype(jnp.float32)          # (1, K)
    tgt = tgt_ref[0].astype(jnp.float32)         # (C, K)

    C, HW = feat.shape
    K = idx.shape[1]

    # In-kernel gather via MXU one-hot matmul: onehot[h, k] = (h == ind[k]).
    # An out-of-range index yields an all-zero column -> pred = 0 (memory safe).
    hw_iota = lax.broadcasted_iota(jnp.int32, (HW, K), 0)
    onehot = (hw_iota == idx).astype(feat.dtype)                       # (HW, K)
    pred = jnp.dot(feat, onehot, preferred_element_type=jnp.float32)   # (C, K) f32

    # |pred*m - tgt*m| == |(pred - tgt) * m| exactly; mask broadcast (1,K)->(C,K).
    diff = (pred - tgt) * m
    num_acc[...] += jnp.sum(jnp.abs(diff), keepdims=True)              # (1, 1)
    den_acc[...] += jnp.float32(C) * jnp.sum(m, keepdims=True)         # (1, 1)

    @pl.when(b == pl.num_programs(0) - 1)
    def _():
        loss_ref[...] = num_acc[...] / (den_acc[...] + jnp.float32(0.0001))


@jax.jit
def reg_l1_loss(output, mask, ind, target):
    """output: (B, C, H, W); mask: (B, K); ind: (B, K) int; target: (B, K, C)."""
    B, C, H, W = output.shape
    K = ind.shape[1]
    HW = H * W

    # Zero-copy / tiny layout plumbing only -- no gather, no dtype upcast,
    # no expanded mask in the wrapper.
    feat = output.reshape(B, C, HW)                       # native layout, source dtype
    idx = ind.astype(jnp.int32).reshape(B, 1, K)
    msk = mask.reshape(B, 1, K)
    tgt = jnp.transpose(target, (0, 2, 1))                # (B, C, K) -- B*C*K elems, tiny

    loss = pl.pallas_call(
        _regl1_kernel,
        grid=(B,),
        in_specs=[
            pl.BlockSpec((1, C, HW), lambda b: (b, 0, 0)),
            pl.BlockSpec((1, 1, K), lambda b: (b, 0, 0)),
            pl.BlockSpec((1, 1, K), lambda b: (b, 0, 0)),
            pl.BlockSpec((1, C, K), lambda b: (b, 0, 0)),
        ],
        out_specs=pl.BlockSpec((1, 1), lambda b: (0, 0)),
        out_shape=jax.ShapeDtypeStruct((1, 1), jnp.float32),
        scratch_shapes=[pltpu.VMEM((1, 1), jnp.float32),
                        pltpu.VMEM((1, 1), jnp.float32)],
        compiler_params=pltpu.CompilerParams(
            # Output accumulates across b -> must be "arbitrary".
            dimension_semantics=("arbitrary",)),
    )(feat, idx, msk, tgt)
    return loss[0, 0]


def _reference(output, mask, ind, target):
    """Pure-JAX reference mirroring the PyTorch module."""
    B, C, H, W = output.shape
    feat = jnp.transpose(output, (0, 2, 3, 1)).reshape(B, H * W, C)
    pred = jnp.take_along_axis(feat, ind[:, :, None].astype(jnp.int32), axis=1)
    m = mask.astype(jnp.float32)[:, :, None] * jnp.ones_like(pred)
    num = jnp.sum(jnp.abs(pred * m - target * m))
    return num / (jnp.sum(m) + 0.0001)


if __name__ == "__main__":
    key = jax.random.PRNGKey(0)
    k1, k2, k3, k4 = jax.random.split(key, 4)

    B, C, H, W, K = 2, 4, 16, 16, 8
    output = jax.random.normal(k1, (B, C, H, W), dtype=jnp.float32)
    ind = jax.random.randint(k2, (B, K), 0, H * W, dtype=jnp.int32)
    mask = (jax.random.uniform(k3, (B, K)) > 0.3).astype(jnp.float32)
    target = jax.random.normal(k4, (B, K, C), dtype=jnp.float32)

    loss = jax.block_until_ready(reg_l1_loss(output, mask, ind, target))
    ref = jax.block_until_ready(_reference(output, mask, ind, target))

    assert jnp.allclose(loss, ref, rtol=1e-5, atol=1e-6), (loss, ref)
    print("KERNEL_OK")
</pallas_src>

<mosaic_0001>
module attributes {stable_mosaic.version = 11 : i64} {
  func.func @_regl1_kernel(%arg0: i32, %arg1: memref<1x4x256xf32, #tpu.memory_space<vmem>>, %arg2: memref<1x1x8xi32, #tpu.memory_space<vmem>>, %arg3: memref<1x1x8xf32, #tpu.memory_space<vmem>>, %arg4: memref<1x4x8xf32, #tpu.memory_space<vmem>>, %arg5: memref<1x1xf32, #tpu.memory_space<vmem>>, %arg6: memref<1x1xf32, #tpu.memory_space<vmem>>, %arg7: memref<1x1xf32, #tpu.memory_space<vmem>>) attributes {dimension_semantics = [#tpu.dimension_semantics<arbitrary>], iteration_bounds = array<i64: 2>, scalar_prefetch = 0 : i64, scratch_operands = 2 : i64, tpu.core_type = #tpu.core_type<tc>, window_params = [{transform_indices = @transform_0, window_bounds = array<i64: 1, 4, 256>}, {transform_indices = @transform_1, window_bounds = array<i64: 1, 1, 8>}, {transform_indices = @transform_2, window_bounds = array<i64: 1, 1, 8>}, {transform_indices = @transform_3, window_bounds = array<i64: 1, 4, 8>}, {pipeline_mode = #tpu.pipeline_mode<synchronous>, transform_indices = @transform_4, window_bounds = array<i64: 1, 1>}]} {
    %c0_i32 = arith.constant 0 : i32
    %0 = arith.cmpi eq, %arg0, %c0_i32 : i32
    %1 = arith.extui %0 : i1 to i32
    %c0_i32_0 = arith.constant 0 : i32
    %2 = arith.cmpi ne, %1, %c0_i32_0 : i32
    scf.if %2 {
      %cst_24 = arith.constant 0.000000e+00 : f32
      %42 = vector.broadcast %cst_24 : f32 to vector<1x1xf32>
      %c0_25 = arith.constant 0 : index
      %c0_26 = arith.constant 0 : index
      %43 = vector.load %arg6[%c0_25, %c0_26] : memref<1x1xf32, #tpu.memory_space<vmem>>, vector<1x1xf32>
      tpu.vector_store %arg6[%c0_25, %c0_26], %42 {strides = array<i32>} : memref<1x1xf32, #tpu.memory_space<vmem>>, vector<1x1xf32>,
      %cst_27 = arith.constant 0.000000e+00 : f32
      %44 = vector.broadcast %cst_27 : f32 to vector<1x1xf32>
      %c0_28 = arith.constant 0 : index
      %c0_29 = arith.constant 0 : index
      %45 = vector.load %arg7[%c0_28, %c0_29] : memref<1x1xf32, #tpu.memory_space<vmem>>, vector<1x1xf32>
      tpu.vector_store %arg7[%c0_28, %c0_29], %44 {strides = array<i32>} : memref<1x1xf32, #tpu.memory_space<vmem>>, vector<1x1xf32>,
    } else {
    }
    %c0 = arith.constant 0 : index
    %c0_1 = arith.constant 0 : index
    %c0_2 = arith.constant 0 : index
    %3 = vector.load %arg1[%c0, %c0_1, %c0_2] : memref<1x4x256xf32, #tpu.memory_space<vmem>>, vector<1x4x256xf32>
    %4 = vector.shape_cast %3 : vector<1x4x256xf32> to vector<4x256xf32>
    %c0_3 = arith.constant 0 : index
    %c0_4 = arith.constant 0 : index
    %c0_5 = arith.constant 0 : index
    %5 = vector.load %arg2[%c0_3, %c0_4, %c0_5] : memref<1x1x8xi32, #tpu.memory_space<vmem>>, vector<1x1x8xi32>
    %6 = vector.shape_cast %5 : vector<1x1x8xi32> to vector<1x8xi32>
    %c0_6 = arith.constant 0 : index
    %c0_7 = arith.constant 0 : index
    %c0_8 = arith.constant 0 : index
    %7 = vector.load %arg3[%c0_6, %c0_7, %c0_8] : memref<1x1x8xf32, #tpu.memory_space<vmem>>, vector<1x1x8xf32>
    %8 = vector.shape_cast %7 : vector<1x1x8xf32> to vector<1x8xf32>
    %c0_9 = arith.constant 0 : index
    %c0_10 = arith.constant 0 : index
    %c0_11 = arith.constant 0 : index
    %9 = vector.load %arg4[%c0_9, %c0_10, %c0_11] : memref<1x4x8xf32, #tpu.memory_space<vmem>>, vector<1x4x8xf32>
    %10 = vector.shape_cast %9 : vector<1x4x8xf32> to vector<4x8xf32>
    %11 = tpu.iota {dimensions = array<i32: 0>} : vector<256x8xi32>
    %12 = vector.broadcast %6 : vector<1x8xi32> to vector<256x8xi32>
    %13 = arith.cmpi eq, %11, %12 : vector<256x8xi32>
    %14 = arith.extui %13 : vector<256x8xi1> to vector<256x8xi32>
    %15 = arith.sitofp %14 : vector<256x8xi32> to vector<256x8xf32>
    %cst = arith.constant dense<0.000000e+00> : vector<4x8xf32>
    %16 = tpu.matmul %4, %15, %cst {dimension_numbers = #tpu.dot_dimension_numbers<[1], [0], [0], [1], [0, 0, 1, 1], [], []>} : vector<4x256xf32>, vector<256x8xf32>, vector<4x8xf32> -> vector<4x8xf32>
    %17 = arith.subf %16, %10 : vector<4x8xf32>
    %18 = vector.broadcast %8 : vector<1x8xf32> to vector<4x8xf32>
    %19 = arith.mulf %17, %18 : vector<4x8xf32>
    %c0_12 = arith.constant 0 : index
    %c0_13 = arith.constant 0 : index
    %20 = vector.load %arg6[%c0_12, %c0_13] : memref<1x1xf32, #tpu.memory_space<vmem>>, vector<1x1xf32>
    %21 = math.absf %19 : vector<4x8xf32>
    %22 = vector.shape_cast %21 : vector<4x8xf32> to vector<1x4x8xf32>
    %cst_14 = arith.constant dense<0.000000e+00> : vector<1xf32>
    %23 = vector.multi_reduction <add>, %22, %cst_14 [1, 2] : vector<1x4x8xf32> to vector<1xf32>
    %24 = vector.shape_cast %23 : vector<1xf32> to vector<1x1x1xf32>
    %25 = vector.extract %24[0, 0, 0] : f32 from vector<1x1x1xf32>
    %26 = vector.broadcast %25 : f32 to vector<1x1xf32>
    %27 = arith.addf %20, %26 : vector<1x1xf32>
    %c0_15 = arith.constant 0 : index
    %c0_16 = arith.constant 0 : index
    %28 = vector.load %arg6[%c0_15, %c0_16] : memref<1x1xf32, #tpu.memory_space<vmem>>, vector<1x1xf32>
    tpu.vector_store %arg6[%c0_15, %c0_16], %27 {strides = array<i32>} : memref<1x1xf32, #tpu.memory_space<vmem>>, vector<1x1xf32>,
    %c0_17 = arith.constant 0 : index
    %c0_18 = arith.constant 0 : index
    %29 = vector.load %arg7[%c0_17, %c0_18] : memref<1x1xf32, #tpu.memory_space<vmem>>, vector<1x1xf32>
    %30 = vector.shape_cast %8 : vector<1x8xf32> to vector<1x1x8xf32>
    %cst_19 = arith.constant dense<0.000000e+00> : vector<1xf32>
    %31 = vector.multi_reduction <add>, %30, %cst_19 [1, 2] : vector<1x1x8xf32> to vector<1xf32>
    %32 = vector.shape_cast %31 : vector<1xf32> to vector<1x1x1xf32>
    %33 = vector.extract %32[0, 0, 0] : f32 from vector<1x1x1xf32>
    %34 = vector.broadcast %33 : f32 to vector<1x1xf32>
    %cst_20 = arith.constant 4.000000e+00 : f32
    %35 = vector.broadcast %cst_20 : f32 to vector<1x1xf32>
    %36 = arith.mulf %35, %34 : vector<1x1xf32>
    %37 = arith.addf %29, %36 : vector<1x1xf32>
    %c0_21 = arith.constant 0 : index
    %c0_22 = arith.constant 0 : index
    %38 = vector.load %arg7[%c0_21, %c0_22] : memref<1x1xf32, #tpu.memory_space<vmem>>, vector<1x1xf32>
    tpu.vector_store %arg7[%c0_21, %c0_22], %37 {strides = array<i32>} : memref<1x1xf32, #tpu.memory_space<vmem>>, vector<1x1xf32>,
    %c1_i32 = arith.constant 1 : i32
    %39 = arith.cmpi eq, %arg0, %c1_i32 : i32
    %40 = arith.extui %39 : i1 to i32
    %c0_i32_23 = arith.constant 0 : i32
    %41 = arith.cmpi ne, %40, %c0_i32_23 : i32
    scf.if %41 {
      %c0_24 = arith.constant 0 : index
      %c0_25 = arith.constant 0 : index
      %42 = vector.load %arg6[%c0_24, %c0_25] : memref<1x1xf32, #tpu.memory_space<vmem>>, vector<1x1xf32>
      %c0_26 = arith.constant 0 : index
      %c0_27 = arith.constant 0 : index
      %43 = vector.load %arg7[%c0_26, %c0_27] : memref<1x1xf32, #tpu.memory_space<vmem>>, vector<1x1xf32>
      %cst_28 = arith.constant 9.99999974E-5 : f32
      %44 = vector.broadcast %cst_28 : f32 to vector<1x1xf32>
      %45 = arith.addf %43, %44 : vector<1x1xf32>
      %46 = arith.divf %42, %45 : vector<1x1xf32>
      %c0_29 = arith.constant 0 : index
      %c0_30 = arith.constant 0 : index
      %47 = vector.load %arg5[%c0_29, %c0_30] : memref<1x1xf32, #tpu.memory_space<vmem>>, vector<1x1xf32>
      tpu.vector_store %arg5[%c0_29, %c0_30], %46 {strides = array<i32>} : memref<1x1xf32, #tpu.memory_space<vmem>>, vector<1x1xf32>,
    } else {
    }
    return
  }
  func.func @transform_0(%arg0: i32) -> (i32, i32, i32) {
    %c0_i32 = arith.constant 0 : i32
    %c0_i32_0 = arith.constant 0 : i32
    %c0_i32_1 = arith.constant 0 : i32
    return %arg0, %c0_i32, %c0_i32_0 : i32, i32, i32
  }
  func.func @transform_1(%arg0: i32) -> (i32, i32, i32) {
    %c0_i32 = arith.constant 0 : i32
    %c0_i32_0 = arith.constant 0 : i32
    %c0_i32_1 = arith.constant 0 : i32
    return %arg0, %c0_i32, %c0_i32_0 : i32, i32, i32
  }
  func.func @transform_2(%arg0: i32) -> (i32, i32, i32) {
    %c0_i32 = arith.constant 0 : i32
    %c0_i32_0 = arith.constant 0 : i32
    %c0_i32_1 = arith.constant 0 : i32
    return %arg0, %c0_i32, %c0_i32_0 : i32, i32, i32
  }
  func.func @transform_3(%arg0: i32) -> (i32, i32, i32) {
    %c0_i32 = arith.constant 0 : i32
    %c0_i32_0 = arith.constant 0 : i32
    %c0_i32_1 = arith.constant 0 : i32
    return %arg0, %c0_i32, %c0_i32_0 : i32, i32, i32
  }
  func.func @transform_4(%arg0: i32) -> (i32, i32) {
    %c0_i32 = arith.constant 0 : i32
    %c0_i32_0 = arith.constant 0 : i32
    %c0_i32_1 = arith.constant 0 : i32
    return %c0_i32, %c0_i32_0 : i32, i32
  }
}

</mosaic_0001>

<llo_original>
// kernel: reg_l1_loss.1
$region0: #{reg_l1_loss.1}
  #allocation0 [shape = 'u32[]', space=smem, size = 0x4, offset = 0x4, fixed_abs, tag = 'smem constant byte address 0x4 - core index']
  #allocation1 [shape = 'u32[144,128]{1,0:T(1,128)}', space=vmem, size = 0x12000, scoped, tag = 'internal scratch']
  #allocation2 [shape = 'f32[1,1]{1,0:T(1,128)}', space=vmem, size = 0x200, scoped, tag = 'scratch operand']
  #allocation3 [shape = 'f32[1,1]{1,0:T(1,128)}', space=vmem, size = 0x200, scoped, tag = 'scratch operand']
  %s0 = inlined_call_operand.vmem [shape: f32[2,4,256], index: 0, kind: input, shape index: {}]
  %s1 = inlined_call_operand.vmem [shape: s32[2,1,8], index: 1, kind: input, shape index: {}]
  %s2 = inlined_call_operand.vmem [shape: f32[2,1,8], index: 2, kind: input, shape index: {}]
  %s3 = inlined_call_operand.vmem [shape: f32[2,4,8], index: 3, kind: input, shape index: {}]
  %s4 = inlined_call_operand.hbm [shape: f32[1,1], index: 4, kind: output, shape index: {}]
  %s5 = sld [smem:[#allocation0]]
  $region57: #{reg_l1_loss.1} parent=0
    _
  %s7 = ssub.s32 1, %s5
  %s8 = scalar_select 0, %s7, %s5
  $region1: #{reg_l1_loss.1} parent=0
    #allocation4 [shape = 'u8[512]{0}', space=vmem, size = 0x400, scoped, tag = 'output window, operand 0, single buffered']
    #allocation5 [shape = 's32[2]{0}', space=sflag, size = 0x8, scoped, tag = 'scoped memory for reg_l1_loss.1']
    %9 = vsyncpa [#allocation5], 0
    loop: start=0, step=1, limit=4
    $region2: #{reg_l1_loss.1} parent=1 // loop_pre_header
      _
    $region3: #{reg_l1_loss.1} parent=1 // loop_header
      %s11 = sphi 0, %s15
      %p12 = scmp.ge.s32.totalorder %s11, 4
      %s21 = sphi 0, %s23
      %s24 = sphi 0, %s21
      %s25 = sphi 0, %s24
      %s41 = sphi 0, %s25
      %s47 = sphi 0, %s49
      %s50 = sphi 0, %s47
      %s51 = sphi 0, %s50
      %s67 = sphi 0, %s51
      %s73 = sphi 0, %s75
      %s76 = sphi 0, %s73
      %s77 = sphi 0, %s76
      %s93 = sphi 0, %s77
      %s99 = sphi 0, %s101
      %s102 = sphi 0, %s99
      %s103 = sphi 0, %s102
      %s119 = sphi 0, %s103
      %s123 = sphi 0, %s123
      %s125 = sphi 0, %s123
      %s126 = sphi 0, %s125
      %s140 = sphi 0, %s126
    $region4: #{reg_l1_loss.1} parent=1 // loop_header_branch
      %14 = sbr.rel (%p12) target = $region8
    $region5: #{reg_l1_loss.1} parent=1 // loop_body
      %s16 = ssub.s32 %s11, 1
      %s17 = ssub.s32 %s11, 2
      %s18 = sadd.s32 %s11, 1
      %s19 = ssub.s32 %s11, %s18
      %p20 = scmp.eq.s32.totalorder %s19, 0
      %s22 = sadd.s32 %s21, 1
      %s23 = scalar_select %p20, %s21, %s22
      %p26 = pneg %p20
      %p27 = scmp.eq.s32.totalorder %s11, 1
      %p28 = por %p26, %p27
      %p29 = scmp.ne.s32.totalorder %s21, %s24
      %p30 = scmp.eq.s32.totalorder %s11, 0
      %p31 = por %p29, %p30
      %p32 = scmp.ne.s32.totalorder %s21, %s24
      %p33 = scmp.eq.s32.totalorder %s16, 1
      %p34 = por %p32, %p33
      %p35 = scmp.ne.s32.totalorder %s24, %s25
      %p36 = scmp.eq.s32.totalorder %s16, 0
      %p37 = por %p35, %p36
      %p38 = scmp.ne.s32.totalorder %s24, %s25
      %p39 = scmp.eq.s32.totalorder %s17, 1
      %p40 = por %p38, %p39
      %p42 = scmp.ne.s32.totalorder %s25, %s41
      %p43 = scmp.eq.s32.totalorder %s17, 0
      %p44 = por %p42, %p43
      %s45 = ssub.s32 %s11, %s18
      %p46 = scmp.eq.s32.totalorder %s45, 0
      %s48 = sadd.s32 %s47, 1
      %s49 = scalar_select %p46, %s47, %s48
      %p52 = pneg %p46
      %p53 = scmp.eq.s32.totalorder %s11, 1
      %p54 = por %p52, %p53
      %p55 = scmp.ne.s32.totalorder %s47, %s50
      %p56 = scmp.eq.s32.totalorder %s11, 0
      %p57 = por %p55, %p56
      %p58 = scmp.ne.s32.totalorder %s47, %s50
      %p59 = scmp.eq.s32.totalorder %s16, 1
      %p60 = por %p58, %p59
      %p61 = scmp.ne.s32.totalorder %s50, %s51
      %p62 = scmp.eq.s32.totalorder %s16, 0
      %p63 = por %p61, %p62
      %p64 = scmp.ne.s32.totalorder %s50, %s51
      %p65 = scmp.eq.s32.totalorder %s17, 1
      %p66 = por %p64, %p65
      %p68 = scmp.ne.s32.totalorder %s51, %s67
      %p69 = scmp.eq.s32.totalorder %s17, 0
      %p70 = por %p68, %p69
      %s71 = ssub.s32 %s11, %s18
      %p72 = scmp.eq.s32.totalorder %s71, 0
      %s74 = sadd.s32 %s73, 1
      %s75 = scalar_select %p72, %s73, %s74
      %p78 = pneg %p72
      %p79 = scmp.eq.s32.totalorder %s11, 1
      %p80 = por %p78, %p79
      %p81 = scmp.ne.s32.totalorder %s73, %s76
      %p82 = scmp.eq.s32.totalorder %s11, 0
      %p83 = por %p81, %p82
      %p84 = scmp.ne.s32.totalorder %s73, %s76
      %p85 = scmp.eq.s32.totalorder %s16, 1
      %p86 = por %p84, %p85
      %p87 = scmp.ne.s32.totalorder %s76, %s77
      %p88 = scmp.eq.s32.totalorder %s16, 0
      %p89 = por %p87, %p88
      %p90 = scmp.ne.s32.totalorder %s76, %s77
      %p91 = scmp.eq.s32.totalorder %s17, 1
      %p92 = por %p90, %p91
      %p94 = scmp.ne.s32.totalorder %s77, %s93
      %p95 = scmp.eq.s32.totalorder %s17, 0
      %p96 = por %p94, %p95
      %s97 = ssub.s32 %s11, %s18
      %p98 = scmp.eq.s32.totalorder %s97, 0
      %s100 = sadd.s32 %s99, 1
      %s101 = scalar_select %p98, %s99, %s100
      %p104 = pneg %p98
      %p105 = scmp.eq.s32.totalorder %s11, 1
      %p106 = por %p104, %p105
      %p107 = scmp.ne.s32.totalorder %s99, %s102
      %p108 = scmp.eq.s32.totalorder %s11, 0
      %p109 = por %p107, %p108
      %p110 = scmp.ne.s32.totalorder %s99, %s102
      %p111 = scmp.eq.s32.totalorder %s16, 1
      %p112 = por %p110, %p111
      %p113 = scmp.ne.s32.totalorder %s102, %s103
      %p114 = scmp.eq.s32.totalorder %s16, 0
      %p115 = por %p113, %p114
      %p116 = scmp.ne.s32.totalorder %s102, %s103
      %p117 = scmp.eq.s32.totalorder %s17, 1
      %p118 = por %p116, %p117
      %p120 = scmp.ne.s32.totalorder %s103, %s119
      %p121 = scmp.eq.s32.totalorder %s17, 0
      %p122 = por %p120, %p121
      %s124 = sadd.s32 %s123, 1
      %p127 = scmp.eq.s32.totalorder %s11, 1
      %p128 = scmp.ne.s32.totalorder %s123, %s125
      %p129 = scmp.eq.s32.totalorder %s11, 0
      %p130 = por %p128, %p129
      %p131 = scmp.ne.s32.totalorder %s123, %s125
      %p132 = scmp.eq.s32.totalorder %s16, 1
      %p133 = por %p131, %p132
      %p134 = scmp.ne.s32.totalorder %s125, %s126
      %p135 = scmp.eq.s32.totalorder %s16, 0
      %p136 = por %p134, %p135
      %p137 = scmp.ne.s32.totalorder %s125, %s126
      %p138 = scmp.eq.s32.totalorder %s17, 1
      %p139 = por %p137, %p138
      %p141 = scmp.ne.s32.totalorder %s126, %s140
      %p142 = scmp.eq.s32.totalorder %s17, 0
      %p143 = por %p141, %p142
      %p144 = scmp.le.s32.totalorder 1, %s11
      %p145 = scmp.lt.s32.totalorder %s11, 3
      %p146 = pnand %p144, %p145
      %p147 = pneg %p146
      // Predicated region
      $region9: #{reg_l1_loss.1} parent=5 // pred_check
        _
      $region10: #{reg_l1_loss.1} parent=5 // pred_check_branch
        %149 = sbr.rel (%p146) target = $region12
      $region11: #{reg_l1_loss.1} parent=5 // pred_region
        %s150 = ssub.s32 %s11, 1
      $region12: #{reg_l1_loss.1} parent=5 // pred_fallthru
        _
      %p151 = scmp.lt.s32.totalorder %s11, 2
      // Predicated region
      $region13: #{reg_l1_loss.1} parent=5 // pred_check
        %p152 = pneg %p151
      $region14: #{reg_l1_loss.1} parent=5 // pred_check_branch
        %154 = sbr.rel (%p152) target = $region16
      $region15: #{reg_l1_loss.1} parent=5 // pred_region
        // Predicated region
        $region17: #{reg_l1_loss.1} parent=15 // pred_check
          %p155 = pneg %p31
        $region18: #{reg_l1_loss.1} parent=15 // pred_check_branch
          %157 = sbr.rel (%p155) target = $region20
        $region19: #{reg_l1_loss.1} parent=15 // pred_region
          %p158 = scmp.lt.s32.totalorder %s11, 1
          %s159 = scalar_select %p158, %s11, 1
          %s160 = smul.addr %s159, 2
          %s161 = smul.addr %s160, 4
          %s162 = scalar_lea.vmem %s0, %s161
        $region20: #{reg_l1_loss.1} parent=15 // pred_fallthru
          _
        // Predicated region
        $region21: #{reg_l1_loss.1} parent=15 // pred_check
          %p163 = pneg %p57
        $region22: #{reg_l1_loss.1} parent=15 // pred_check_branch
          %165 = sbr.rel (%p163) target = $region24
        $region23: #{reg_l1_loss.1} parent=15 // pred_region
          %p166 = scmp.lt.s32.totalorder %s11, 1
          %s167 = scalar_select %p166, %s11, 1
          %s168 = scalar_lea.vmem %s1, %s167
        $region24: #{reg_l1_loss.1} parent=15 // pred_fallthru
          _
        // Predicated region
        $region25: #{reg_l1_loss.1} parent=15 // pred_check
          %p169 = pneg %p83
        $region26: #{reg_l1_loss.1} parent=15 // pred_check_branch
          %171 = sbr.rel (%p169) target = $region28
        $region27: #{reg_l1_loss.1} parent=15 // pred_region
          %p172 = scmp.lt.s32.totalorder %s11, 1
          %s173 = scalar_select %p172, %s11, 1
          %s174 = scalar_lea.vmem %s2, %s173
        $region28: #{reg_l1_loss.1} parent=15 // pred_fallthru
          _
        // Predicated region
        $region29: #{reg_l1_loss.1} parent=15 // pred_check
          %p175 = pneg %p109
        $region30: #{reg_l1_loss.1} parent=15 // pred_check_branch
          %177 = sbr.rel (%p175) target = $region32
        $region31: #{reg_l1_loss.1} parent=15 // pred_region
          %p178 = scmp.lt.s32.totalorder %s11, 1
          %s179 = scalar_select %p178, %s11, 1
          %s180 = smul.addr %s179, 4
          %s181 = scalar_lea.vmem %s3, %s180
        $region32: #{reg_l1_loss.1} parent=15 // pred_fallthru
          _
      $region16: #{reg_l1_loss.1} parent=5 // pred_fallthru
        _
      %p182 = scmp.le.s32.totalorder 1, %s11
      %p183 = scmp.lt.s32.totalorder %s11, 3
      %p184 = pnand %p182, %p183
      %p185 = pneg %p184
      // Predicated region
      $region33: #{reg_l1_loss.1} parent=5 // pred_check
        _
      $region34: #{reg_l1_loss.1} parent=5 // pred_check_branch
        %187 = sbr.rel (%p184) target = $region36
      $region35: #{reg_l1_loss.1} parent=5 // pred_region
        %s188 = ssub.s32 %s11, 1
        %p189 = scmp.lt.s32.totalorder %s16, 1
        %s190 = scalar_select %p189, %s16, 1
        %s191 = smul.addr %s190, 2
        %s192 = smul.addr %s191, 4
        %s193 = scalar_lea.vmem %s0, %s192
        %p194 = pneg %p37
        %p195 = pneg %p34
        %p196 = scmp.lt.s32.totalorder %s16, 1
        %s197 = scalar_select %p196, %s16, 1
        %s198 = scalar_lea.vmem %s1, %s197
        %p199 = pneg %p63
        %p200 = pneg %p60
        %p201 = scmp.lt.s32.totalorder %s16, 1
        %s202 = scalar_select %p201, %s16, 1
        %s203 = scalar_lea.vmem %s2, %s202
        %p204 = pneg %p89
        %p205 = pneg %p86
        %p206 = scmp.lt.s32.totalorder %s16, 1
        %s207 = scalar_select %p206, %s16, 1
        %s208 = smul.addr %s207, 4
        %s209 = scalar_lea.vmem %s3, %s208
        %p210 = pneg %p115
        %p211 = pneg %p112
        %p212 = pneg %p136
        %p213 = pneg %p133
        %p214 = scmp.lt.s32.totalorder %s16, 1
        %s215 = scalar_select %p214, %s16, 1
        %s216 = smul.addr %s215, 2
        %s217 = smul.addr %s216, 4
        %s218 = scalar_lea.vmem %s0, %s217
        %p219 = scmp.lt.s32.totalorder %s16, 1
        %s220 = scalar_select %p219, %s16, 1
        %s221 = scalar_lea.vmem %s1, %s220
        %p222 = scmp.lt.s32.totalorder %s16, 1
        %s223 = scalar_select %p222, %s16, 1
        %s224 = scalar_lea.vmem %s2, %s223
        %p225 = scmp.lt.s32.totalorder %s16, 1
        %s226 = scalar_select %p225, %s16, 1
        %s227 = smul.addr %s226, 4
        %s228 = scalar_lea.vmem %s3, %s227
        %p229 = scmp.eq.s32.totalorder %s16, 0
        // Predicated region
        $region37: #{reg_l1_loss.1} parent=35 // pred_check
          %p230 = pneg %p229
        $region38: #{reg_l1_loss.1} parent=35 // pred_check_branch
          %232 = sbr.rel (%p230) target = $region40
        $region39: #{reg_l1_loss.1} parent=35 // pred_region
          %vm233 = vcmask 0
          %234 = vst.msk [vmem:[#allocation2] sm:$0x1] %vm233, 0.0
          %235 = vst.msk [vmem:[#allocation3] sm:$0x1] %vm233, 0.0
        $region40: #{reg_l1_loss.1} parent=35 // pred_fallthru
          _
        %v236 = vld [vmem:[%s218] sm:$0xff]
        %v237 = vld [vmem:[%s221] sm:$0x1]
        %v238 = vld [vmem:[%s224] sm:$0x1]
        %v239 = vld [vmem:[%s228] sm:$0xf]
        %v240 = vlaneseq
        %v241 = vshrl.u32 %v240, 7
        %v242 = vadd.s32 %v241, 8
        %v243 = vadd.s32 %v241, 16
        %v244 = vadd.s32 %v241, 24
        %v245 = vadd.s32 %v241, 32
        %v246 = vadd.s32 %v241, 40
        %v247 = vadd.s32 %v241, 48
        %v248 = vadd.s32 %v241, 56
        %v249 = vadd.s32 %v241, 64
        %v250 = vadd.s32 %v241, 72
        %v251 = vadd.s32 %v241, 80
        %v252 = vadd.s32 %v241, 88
        %v253 = vadd.s32 %v241, 96
        %v254 = vadd.s32 %v241, 104
        %v255 = vadd.s32 %v241, 112
        %v256 = vadd.s32 %v241, 120
        %v257 = vadd.s32 %v241, 128
        %v258 = vadd.s32 %v241, 136
        %v259 = vadd.s32 %v241, 144
        %v260 = vadd.s32 %v241, 152
        %v261 = vadd.s32 %v241, 160
        %v262 = vadd.s32 %v241, 168
        %v263 = vadd.s32 %v241, 176
        %v264 = vadd.s32 %v241, 184
        %v265 = vadd.s32 %v241, 192
        %v266 = vadd.s32 %v241, 200
        %v267 = vadd.s32 %v241, 208
        %v268 = vadd.s32 %v241, 216
        %v269 = vadd.s32 %v241, 224
        %v270 = vadd.s32 %v241, 232
        %v271 = vadd.s32 %v241, 240
        %v272 = vadd.s32 %v241, 248
        %v273 = vlaneseq
        %v274 = vshrl.u32 %v273, 7
        %v275 = vsub.s32 0, %v274
        %v276 = vrot.slane %v237, %v275
        %vm277 = vcmp.eq.s32.totalorder %v241, %v276
        %vm278 = vcmp.eq.s32.totalorder %v242, %v276
        %vm279 = vcmp.eq.s32.totalorder %v243, %v276
        %vm280 = vcmp.eq.s32.totalorder %v244, %v276
        %vm281 = vcmp.eq.s32.totalorder %v245, %v276
        %vm282 = vcmp.eq.s32.totalorder %v246, %v276
        %vm283 = vcmp.eq.s32.totalorder %v247, %v276
        %vm284 = vcmp.eq.s32.totalorder %v248, %v276
        %vm285 = vcmp.eq.s32.totalorder %v249, %v276
        %vm286 = vcmp.eq.s32.totalorder %v250, %v276
        %vm287 = vcmp.eq.s32.totalorder %v251, %v276
        %vm288 = vcmp.eq.s32.totalorder %v252, %v276
        %vm289 = vcmp.eq.s32.totalorder %v253, %v276
        %vm290 = vcmp.eq.s32.totalorder %v254, %v276
        %vm291 = vcmp.eq.s32.totalorder %v255, %v276
        %vm292 = vcmp.eq.s32.totalorder %v256, %v276
        %vm293 = vcmp.eq.s32.totalorder %v257, %v276
        %vm294 = vcmp.eq.s32.totalorder %v258, %v276
        %vm295 = vcmp.eq.s32.totalorder %v259, %v276
        %vm296 = vcmp.eq.s32.totalorder %v260, %v276
        %vm297 = vcmp.eq.s32.totalorder %v261, %v276
        %vm298 = vcmp.eq.s32.totalorder %v262, %v276
        %vm299 = vcmp.eq.s32.totalorder %v263, %v276
        %vm300 = vcmp.eq.s32.totalorder %v264, %v276
        %vm301 = vcmp.eq.s32.totalorder %v265, %v276
        %vm302 = vcmp.eq.s32.totalorder %v266, %v276
        %vm303 = vcmp.eq.s32.totalorder %v267, %v276
        %vm304 = vcmp.eq.s32.totalorder %v268, %v276
        %vm305 = vcmp.eq.s32.totalorder %v269, %v276
        %vm306 = vcmp.eq.s32.totalorder %v270, %v276
        %vm307 = vcmp.eq.s32.totalorder %v271, %v276
        %vm308 = vcmp.eq.s32.totalorder %v272, %v276
        %v309 = vsel %vm277, 1, 0
        %v310 = vsel %vm278, 1, 0
        %v311 = vsel %vm279, 1, 0
        %v312 = vsel %vm280, 1, 0
        %v313 = vsel %vm281, 1, 0
        %v314 = vsel %vm282, 1, 0
        %v315 = vsel %vm283, 1, 0
        %v316 = vsel %vm284, 1, 0
        %v317 = vsel %vm285, 1, 0
        %v318 = vsel %vm286, 1, 0
        %v319 = vsel %vm287, 1, 0
        %v320 = vsel %vm288, 1, 0
        %v321 = vsel %vm289, 1, 0
        %v322 = vsel %vm290, 1, 0
        %v323 = vsel %vm291, 1, 0
        %v324 = vsel %vm292, 1, 0
        %v325 = vsel %vm293, 1, 0
        %v326 = vsel %vm294, 1, 0
        %v327 = vsel %vm295, 1, 0
        %v328 = vsel %vm296, 1, 0
        %v329 = vsel %vm297, 1, 0
        %v330 = vsel %vm298, 1, 0
        %v331 = vsel %vm299, 1, 0
        %v332 = vsel %vm300, 1, 0
        %v333 = vsel %vm301, 1, 0
        %v334 = vsel %vm302, 1, 0
        %v335 = vsel %vm303, 1, 0
        %v336 = vsel %vm304, 1, 0
        %v337 = vsel %vm305, 1, 0
        %v338 = vsel %vm306, 1, 0
        %v339 = vsel %vm307, 1, 0
        %v340 = vsel %vm308, 1, 0
        %v341 = vcvt.s32.f32 %v309
        %v342 = vcvt.s32.f32 %v310
        %v343 = vcvt.s32.f32 %v311
        %v344 = vcvt.s32.f32 %v312
        %v345 = vcvt.s32.f32 %v313
        %v346 = vcvt.s32.f32 %v314
        %v347 = vcvt.s32.f32 %v315
        %v348 = vcvt.s32.f32 %v316
        %v349 = vcvt.s32.f32 %v317
        %v350 = vcvt.s32.f32 %v318
        %v351 = vcvt.s32.f32 %v319
        %v352 = vcvt.s32.f32 %v320
        %v353 = vcvt.s32.f32 %v321
        %v354 = vcvt.s32.f32 %v322
        %v355 = vcvt.s32.f32 %v323
        %v356 = vcvt.s32.f32 %v324
        %v357 = vcvt.s32.f32 %v325
        %v358 = vcvt.s32.f32 %v326
        %v359 = vcvt.s32.f32 %v327
        %v360 = vcvt.s32.f32 %v328
        %v361 = vcvt.s32.f32 %v329
        %v362 = vcvt.s32.f32 %v330
        %v363 = vcvt.s32.f32 %v331
        %v364 = vcvt.s32.f32 %v332
        %v365 = vcvt.s32.f32 %v333
        %v366 = vcvt.s32.f32 %v334
        %v367 = vcvt.s32.f32 %v335
        %v368 = vcvt.s32.f32 %v336
        %v369 = vcvt.s32.f32 %v337
        %v370 = vcvt.s32.f32 %v338
        %v371 = vcvt.s32.f32 %v339
        %v372 = vcvt.s32.f32 %v340
        %v374 = vcombine.high %v236, %v236
        %376 = vmatprep.subr.mxu0 0.0
        %377 = vmatpush1.msra.mxu0 %v341
        %378 = vmatprep.subr.mxu0 0.0
        %379 = vmatpush1.msra.mxu0 %v342
        %380 = vmatprep.subr.mxu0 0.0
        %381 = vmatpush1.msra.mxu0 %v343
        %382 = vmatprep.subr.mxu0 0.0
        %383 = vmatpush1.msra.mxu0 %v344
        %384 = vmatprep.subr.mxu0 0.0
        %385 = vmatpush1.msra.mxu0 %v345
        %386 = vmatprep.subr.mxu0 0.0
        %387 = vmatpush1.msra.mxu0 %v346
        %388 = vmatprep.subr.mxu0 0.0
        %389 = vmatpush1.msra.mxu0 %v347
        %390 = vmatprep.subr.mxu0 0.0
        %391 = vmatpush1.msra.mxu0 %v348
        %392 = vmatprep.subr.mxu0 0.0
        %393 = vmatpush1.msra.mxu0 %v349
        %394 = vmatprep.subr.mxu0 0.0
        %395 = vmatpush1.msra.mxu0 %v350
        %396 = vmatprep.subr.mxu0 0.0
        %397 = vmatpush1.msra.mxu0 %v351
        %398 = vmatprep.subr.mxu0 0.0
        %399 = vmatpush1.msra.mxu0 %v352
        %400 = vmatprep.subr.mxu0 0.0
        %401 = vmatpush1.msra.mxu0 %v353
        %402 = vmatprep.subr.mxu0 0.0
        %403 = vmatpush1.msra.mxu0 %v354
        %404 = vmatprep.subr.mxu0 0.0
        %405 = vmatpush1.msra.mxu0 %v355
        %406 = vmatprep.subr.mxu0 0.0
        %407 = vmatpush1.msra.mxu0 %v356
        %408 = vmatprep.subr.mxu0 0.0
        %409 = vmatpush1.msra.mxu0 %v357
        %410 = vmatprep.subr.mxu0 0.0
        %411 = vmatpush1.msra.mxu0 %v358
        %412 = vmatprep.subr.mxu0 0.0
        %413 = vmatpush1.msra.mxu0 %v359
        %414 = vmatprep.subr.mxu0 0.0
        %415 = vmatpush1.msra.mxu0 %v360
        %416 = vmatprep.subr.mxu0 0.0
        %417 = vmatpush1.msra.mxu0 %v361
        %418 = vmatprep.subr.mxu0 0.0
        %419 = vmatpush1.msra.mxu0 %v362
        %420 = vmatprep.subr.mxu0 0.0
        %421 = vmatpush1.msra.mxu0 %v363
        %422 = vmatprep.subr.mxu0 0.0
        %423 = vmatpush1.msra.mxu0 %v364
        %424 = vmatprep.subr.mxu0 0.0
        %425 = vmatpush1.msra.mxu0 %v365
        %426 = vmatprep.subr.mxu0 0.0
        %427 = vmatpush1.msra.mxu0 %v366
        %428 = vmatprep.subr.mxu0 0.0
        %429 = vmatpush1.msra.mxu0 %v367
        %430 = vmatprep.subr.mxu0 0.0
        %431 = vmatpush1.msra.mxu0 %v368
        %432 = vmatprep.subr.mxu0 0.0
        %433 = vmatpush1.msra.mxu0 %v369
        %434 = vmatprep.subr.mxu0 0.0
        %435 = vmatpush1.msra.mxu0 %v370
        %436 = vmatprep.subr.mxu0 0.0
        %437 = vmatpush1.msra.mxu0 %v371
        %438 = vmatprep.subr.mxu0 0.0
        %439 = vmatpush1.msra.mxu0 %v372
        %440 = vmatprep.mubr.f32.mxu0 %v374
        %441 = vmatmul.mubr.f32.gmra.mrb[0].mxu0 %v236
        %v442 = vpop.f32.mrb[0].mxu0
        %v443 = vadd.f32 0.0, %v442
        %v444 = vpop.f32.mrb[0].mxu0
        %445 = vdwg.mxu0
        %v446 = vsub.f32 %v443, %v239
        %v448 = vlaneseq
        %v449 = vshrl.u32 %v448, 7
        %v450 = vsub.s32 0, %v449
        %v451 = vrot.slane %v238, %v450
        %v453 = vmul.f32 %v446, %v451
        %v454 = vld [vmem:[#allocation2] sm:$0x1]
        %v455 = vand.u32 2147483647, %v453
        %vm456 = vcmask 60416
        %v457 = vsel %vm456, %v455, 0.0
        %458 = vadd.xlane.f32.xlu0 %v457
        %v459 = vpop.xlane.xlu0 %458
        %v460 = vrot.slane %v459, 4
        %v461 = vadd.f32 %v459, %v460
        %v462 = vrot.slane %v461, 2
        %v463 = vadd.f32 %v461, %v462
        %v464 = vrot.slane %v463, 1
        %v465 = vadd.f32 %v463, %v464
        %s466 = vtos %v465
        %v467 = vstv %s466
        %v468 = vadd.f32 %v454, %v467
        %vm469 = vcmask 0
        %470 = vst.msk [vmem:[#allocation2] sm:$0x1] %vm469, %v468
        %v471 = vld [vmem:[#allocation3] sm:$0x1]
        %vm472 = vcmask 57344
        %v473 = vsel %vm472, %v238, 0.0
        %474 = vadd.xlane.f32.xlu0 %v473
        %v475 = vpop.xlane.xlu0 %474
        %v476 = vrot.slane %v475, 4
        %v477 = vadd.f32 %v475, %v476
        %v478 = vrot.slane %v477, 2
        %v479 = vadd.f32 %v477, %v478
        %v480 = vrot.slane %v479, 1
        %v481 = vadd.f32 %v479, %v480
        %s482 = vtos %v481
        %v483 = vstv %s482
        %v484 = vmul.f32 %v483, 4.0
        %v485 = vadd.f32 %v471, %v484
        %486 = vst.msk [vmem:[#allocation3] sm:$0x1] %vm469, %v485
        %p487 = scmp.eq.s32.totalorder %s16, 1
        // Predicated region
        $region41: #{reg_l1_loss.1} parent=35 // pred_check
          %p488 = pneg %p487
        $region42: #{reg_l1_loss.1} parent=35 // pred_check_branch
          %490 = sbr.rel (%p488) target = $region44
        $region43: #{reg_l1_loss.1} parent=35 // pred_region
          %v491 = vld [vmem:[#allocation2] sm:$0x1]
          %v492 = vld [vmem:[#allocation3] sm:$0x1]
          %v493 = vadd.f32 %v492, 0.0001
          %v494 = vrcp.pop %v493
          %v495 = vmul.f32 %v491, %v494
          %496 = vst.msk [vmem:[#allocation4] sm:$0x1] %vm469, %v495
        $region44: #{reg_l1_loss.1} parent=35 // pred_fallthru
          _
        // Predicated region
        $region45: #{reg_l1_loss.1} parent=35 // pred_check
          %p497 = pneg %p133
        $region46: #{reg_l1_loss.1} parent=35 // pred_check_branch
          %499 = sbr.rel (%p497) target = $region48
        $region47: #{reg_l1_loss.1} parent=35 // pred_region
          %s501 = ssub.s32 16, 16
          %502 = vsyncadd [#allocation5], %s501
          %s504 = sshll.u32 [#allocation4], 4
          %s505 = int_to_ptr.vmem [resolvable:$true] %s504
          %507 = dma.vmem_to_hbm [thread:$0]  %s505, 16, %s4, [#allocation5]
        $region48: #{reg_l1_loss.1} parent=35 // pred_fallthru
          _
        // Predicated region
        $region49: #{reg_l1_loss.1} parent=35 // pred_check
          %p508 = pneg %p133
        $region50: #{reg_l1_loss.1} parent=35 // pred_check_branch
          %510 = sbr.rel (%p508) target = $region52
        $region51: #{reg_l1_loss.1} parent=35 // pred_region
          %511 = dma.done [#allocation5], 16
        $region52: #{reg_l1_loss.1} parent=35 // pred_fallthru
          _
      $region36: #{reg_l1_loss.1} parent=5 // pred_fallthru
        _
      %p512 = scmp.le.s32.totalorder 2, %s11
      // Predicated region
      $region53: #{reg_l1_loss.1} parent=5 // pred_check
        %p513 = pneg %p512
      $region54: #{reg_l1_loss.1} parent=5 // pred_check_branch
        %515 = sbr.rel (%p513) target = $region56
      $region55: #{reg_l1_loss.1} parent=5 // pred_region
        %s516 = ssub.s32 %s11, 2
      $region56: #{reg_l1_loss.1} parent=5 // pred_fallthru
        _
    $region6: #{reg_l1_loss.1} parent=1 // loop_footer
      %s15 = sadd.s32 1, %s11
    $region7: #{reg_l1_loss.1} parent=1 // loop_footer_branch
      %10 = sbr.rel target = $region3
    $region8: #{reg_l1_loss.1} parent=1 // loop_exit
      _
    %517 = vsyncpa [#allocation5], 1
    %s518 = scalar_lea.sflag [#allocation5], 1
    %519 = vsyncpa %s518, 1

</llo_original>
